<compile_context>
chip_gen: v7x
topology: tpu7x:2x2x1
jax: 0.10.0
libtpu: 0.0.40
codegen_flags: <defaults>
</compile_context>

<pallas_src>
import functools
import math

import jax
import jax.numpy as jnp
from jax.experimental import pallas as pl
from jax.experimental.pallas import tpu as pltpu


# ----------------------------------------------------------------------------
# Fused Downsample kernel: conv (tap-wise matmul) + bias + InstanceNorm + LeakyReLU
# ----------------------------------------------------------------------------
def _downsample_kernel(a_ref, b_ref, bias_ref, o_ref, acc_ref, *,
                       m, ow, apply_norm, eps, neg_slope):
    # Grid: (batch n, OC tile j, plane r) -- r is the reduction axis (last).
    r = pl.program_id(2)

    @pl.when(r == 0)
    def _():
        acc_ref[...] = jnp.zeros_like(acc_ref)

    a_plane = a_ref[0, 0]                                # (M + OW, C) float32
    partial = None
    for dh in (0, 1):                                    # two row shifts share this plane
        a_mat = a_plane[dh * ow:dh * ow + m, :].astype(jnp.bfloat16)   # (M, C)
        w_tap = b_ref[0, dh]                             # (C, TN) bfloat16
        contrib = jnp.dot(a_mat, w_tap, preferred_element_type=jnp.float32)
        partial = contrib if partial is None else partial + contrib
    acc_ref[...] += partial

    @pl.when(r == pl.num_programs(2) - 1)
    def _():
        y = acc_ref[...] + bias_ref[...]                 # (M, TN) + (1, TN)
        if apply_norm:
            # InstanceNorm2d(affine=False): stats over all spatial positions
            # (the full M rows of this block), biased variance, eps=1e-5.
            mean = jnp.mean(y, axis=0, keepdims=True)
            var = jnp.mean(jnp.square(y - mean), axis=0, keepdims=True)
            y = (y - mean) * jax.lax.rsqrt(var + eps)
        y = jnp.where(y >= 0, y, neg_slope * y)          # LeakyReLU(0.2)
        o_ref[...] = y[None].astype(o_ref.dtype)


def downsample_forward(x_nchw, weight, bias, *, apply_norm=True,
                       eps=1e-5, neg_slope=0.2):
    """Downsample forward pass (NCHW in / NCHW out, PyTorch weight layout)."""
    N, C, H, W = x_nchw.shape
    OC, IC, KH, KW = weight.shape
    assert IC == C and (KH, KW) == (4, 4)
    assert H % 2 == 0 and W % 2 == 0, "stride-2 kernel expects even H, W"
    OH, OW = H // 2, W // 2
    assert OW % 8 == 0, "kernel assumes OW to be a multiple of 8 (sublane tile)"
    M = OH * OW
    HP = OH + 1                                  # rows per plane (incl. 1-row halo)

    # Lane-dense output channels: pad to a multiple of 128; 256-wide tiles when
    # possible (full MXU width on v6e/v7x), 128 otherwise.
    OCP = max(128, ((OC + 127) // 128) * 128)
    TN = 256 if OCP % 256 == 0 else 128
    J = OCP // TN

    x_nhwc = jnp.transpose(x_nchw, (0, 2, 3, 1)).astype(jnp.float32)
    xp = jnp.pad(x_nhwc, ((0, 0), (1, 1), (1, 1), (0, 0)))

    # 8 planes indexed by r = py*4 + kw:
    #   plane[r][n, i, ow, c] == padded_x[n, 2*i + py, kw + 2*ow, c]
    # so conv tap (kh, kw) of output (oh, ow) lives at plane[(kh%2)*4 + kw],
    # row (oh + kh//2, ow) -> a contiguous row block after flattening (i, ow).
    planes = [xp[:, py::2, kw:kw + 2 * OW:2, :]
              for py in (0, 1) for kw in range(4)]
    a8 = jnp.stack(planes, axis=0).reshape(8, N, HP * OW, C)

    # Weights: (OC, C, 4, 4) -> (plane r, row-shift dh, C, OCP), bf16 for the MXU.
    wt = jnp.transpose(weight, (2, 3, 1, 0))             # (kh, kw, C, OC)
    wt = wt.reshape(2, 2, 4, C, OC)                      # (dh, py, kw, C, OC); kh = 2*dh + py
    wt = jnp.transpose(wt, (1, 2, 0, 3, 4))              # (py, kw, dh, C, OC)
    w_planes = wt.reshape(8, 2, C, OC)
    w_planes = jnp.pad(w_planes, ((0, 0), (0, 0), (0, 0), (0, OCP - OC)))
    w_planes = w_planes.astype(jnp.bfloat16)

    bias_p = jnp.pad(bias.astype(jnp.float32), (0, OCP - OC)).reshape(1, OCP)

    kern = functools.partial(_downsample_kernel, m=M, ow=OW,
                             apply_norm=apply_norm, eps=eps,
                             neg_slope=neg_slope)

    out_flat = pl.pallas_call(
        kern,
        out_shape=jax.ShapeDtypeStruct((N, M, OCP), jnp.float32),
        grid_spec=pltpu.PrefetchScalarGridSpec(
            num_scalar_prefetch=0,
            grid=(N, J, 8),
            in_specs=[
                pl.BlockSpec((1, 1, HP * OW, C), lambda n, j, r: (r, n, 0, 0)),
                pl.BlockSpec((1, 2, C, TN), lambda n, j, r: (r, 0, 0, j)),
                pl.BlockSpec((1, TN), lambda n, j, r: (0, j)),
            ],
            out_specs=pl.BlockSpec((1, M, TN), lambda n, j, r: (n, 0, j)),
            scratch_shapes=[pltpu.VMEM((M, TN), jnp.float32)],
        ),
        compiler_params=pltpu.CompilerParams(
            dimension_semantics=("parallel", "parallel", "arbitrary"),
            vmem_limit_bytes=48 * 1024 * 1024,
        ),
    )(a8, w_planes, bias_p)

    out = out_flat[:, :, :OC].reshape(N, OH, OW, OC)
    return jnp.transpose(out, (0, 3, 1, 2))              # NHWC -> NCHW


# ----------------------------------------------------------------------------
# Pure-JAX reference (for validation)
# ----------------------------------------------------------------------------
def downsample_reference(x_nchw, weight, bias, *, apply_norm=True,
                         eps=1e-5, neg_slope=0.2):
    y = jax.lax.conv_general_dilated(
        x_nchw, weight, window_strides=(2, 2), padding=((1, 1), (1, 1)),
        dimension_numbers=("NCHW", "OIHW", "NCHW"))
    y = y + bias[None, :, None, None]
    if apply_norm:
        mean = jnp.mean(y, axis=(2, 3), keepdims=True)
        var = jnp.mean(jnp.square(y - mean), axis=(2, 3), keepdims=True)
        y = (y - mean) * jax.lax.rsqrt(var + eps)
    return jnp.where(y >= 0, y, neg_slope * y)


if __name__ == "__main__":
    key = jax.random.PRNGKey(0)
    kx, kw_, kb = jax.random.split(key, 3)

    # Small shapes consistent with Downsample: batch=2, in_ch=4, spatial=16.
    N, C, H, W = 2, 4, 16, 16
    OC = 64

    x = jax.random.normal(kx, (N, C, H, W), dtype=jnp.float32)
    s = 1.0 / math.sqrt(C * 4 * 4)
    weight = jax.random.uniform(kw_, (OC, C, 4, 4), jnp.float32, -s, s)
    bias = jax.random.uniform(kb, (OC,), jnp.float32, -s, s)

    fwd_norm = jax.jit(functools.partial(downsample_forward, apply_norm=True))
    fwd_plain = jax.jit(functools.partial(downsample_forward, apply_norm=False))

    out_norm = fwd_norm(x, weight, bias)      # apply_instancenorm=True path
    out_plain = fwd_plain(x, weight, bias)    # apply_instancenorm=False path
    jax.block_until_ready((out_norm, out_plain))

    assert out_norm.shape == (N, OC, H // 2, W // 2), out_norm.shape
    assert out_plain.shape == (N, OC, H // 2, W // 2), out_plain.shape
    assert out_norm.dtype == jnp.float32

    ref_norm = downsample_reference(x, weight, bias, apply_norm=True)
    ref_plain = downsample_reference(x, weight, bias, apply_norm=False)

    assert bool(jnp.all(jnp.isfinite(out_norm)))
    assert bool(jnp.all(jnp.isfinite(out_plain)))
    err_norm = float(jnp.max(jnp.abs(out_norm - ref_norm)))
    err_plain = float(jnp.max(jnp.abs(out_plain - ref_plain)))
    # bf16 weights on the MXU (f32 accumulation) -> small bounded mismatch.
    assert err_norm < 0.1, err_norm
    assert err_plain < 0.1, err_plain

    print("KERNEL_OK")
</pallas_src>

<mosaic_0001>
module attributes {stable_mosaic.version = 11 : i64} {
  func.func @_downsample_kernel(%arg0: i32, %arg1: i32, %arg2: i32, %arg3: memref<1x1x72x4xf32, #tpu.memory_space<vmem>>, %arg4: memref<1x2x4x128xbf16, #tpu.memory_space<vmem>>, %arg5: memref<1x128xf32, #tpu.memory_space<vmem>>, %arg6: memref<1x64x128xf32, #tpu.memory_space<vmem>>, %arg7: memref<64x128xf32, #tpu.memory_space<vmem>>) attributes {dimension_semantics = [#tpu.dimension_semantics<parallel>, #tpu.dimension_semantics<parallel>, #tpu.dimension_semantics<arbitrary>], iteration_bounds = array<i64: 2, 1, 8>, scalar_prefetch = 0 : i64, scratch_operands = 1 : i64, tpu.core_type = #tpu.core_type<tc>, window_params = [{transform_indices = @transform_0, window_bounds = array<i64: 1, 1, 72, 4>}, {transform_indices = @transform_1, window_bounds = array<i64: 1, 2, 4, 128>}, {transform_indices = @transform_2, window_bounds = array<i64: 1, 128>}, {transform_indices = @transform_3, window_bounds = array<i64: 1, 64, 128>}]} {
    %c0_i32 = arith.constant 0 : i32
    %0 = arith.cmpi eq, %arg2, %c0_i32 : i32
    %1 = arith.extui %0 : i1 to i32
    %c0_i32_0 = arith.constant 0 : i32
    %2 = arith.cmpi ne, %1, %c0_i32_0 : i32
    scf.if %2 {
      %cst_17 = arith.constant 0.000000e+00 : f32
      %22 = vector.broadcast %cst_17 : f32 to vector<64x128xf32>
      %c0_18 = arith.constant 0 : index
      %c0_19 = arith.constant 0 : index
      %23 = vector.load %arg7[%c0_18, %c0_19] : memref<64x128xf32, #tpu.memory_space<vmem>>, vector<64x128xf32>
      tpu.vector_store %arg7[%c0_18, %c0_19], %22 {strides = array<i32>} : memref<64x128xf32, #tpu.memory_space<vmem>>, vector<64x128xf32>,
    } else {
    }
    %c0 = arith.constant 0 : index
    %c0_1 = arith.constant 0 : index
    %c0_2 = arith.constant 0 : index
    %c0_3 = arith.constant 0 : index
    %3 = vector.load %arg3[%c0, %c0_1, %c0_2, %c0_3] : memref<1x1x72x4xf32, #tpu.memory_space<vmem>>, vector<1x1x72x4xf32>
    %4 = vector.shape_cast %3 : vector<1x1x72x4xf32> to vector<72x4xf32>
    %5 = vector.extract_strided_slice %4 {offsets = [0, 0], sizes = [64, 4], strides = [1, 1]} : vector<72x4xf32> to vector<64x4xf32>
    %6 = arith.truncf %5 : vector<64x4xf32> to vector<64x4xbf16>
    %c0_4 = arith.constant 0 : index
    %c0_5 = arith.constant 0 : index
    %c0_6 = arith.constant 0 : index
    %c0_7 = arith.constant 0 : index
    %7 = vector.load %arg4[%c0_4, %c0_5, %c0_6, %c0_7] : memref<1x2x4x128xbf16, #tpu.memory_space<vmem>>, vector<1x1x4x128xbf16>
    %8 = vector.shape_cast %7 : vector<1x1x4x128xbf16> to vector<4x128xbf16>
    %cst = arith.constant dense<0.000000e+00> : vector<64x128xf32>
    %9 = tpu.matmul %6, %8, %cst {dimension_numbers = #tpu.dot_dimension_numbers<[1], [0], [0], [1], [0, 0, 1, 1], [], []>} : vector<64x4xbf16>, vector<4x128xbf16>, vector<64x128xf32> -> vector<64x128xf32>
    %10 = vector.extract_strided_slice %4 {offsets = [8, 0], sizes = [64, 4], strides = [1, 1]} : vector<72x4xf32> to vector<64x4xf32>
    %11 = arith.truncf %10 : vector<64x4xf32> to vector<64x4xbf16>
    %c0_8 = arith.constant 0 : index
    %c1 = arith.constant 1 : index
    %c0_9 = arith.constant 0 : index
    %c0_10 = arith.constant 0 : index
    %12 = vector.load %arg4[%c0_8, %c1, %c0_9, %c0_10] : memref<1x2x4x128xbf16, #tpu.memory_space<vmem>>, vector<1x1x4x128xbf16>
    %13 = vector.shape_cast %12 : vector<1x1x4x128xbf16> to vector<4x128xbf16>
    %cst_11 = arith.constant dense<0.000000e+00> : vector<64x128xf32>
    %14 = tpu.matmul %11, %13, %cst_11 {dimension_numbers = #tpu.dot_dimension_numbers<[1], [0], [0], [1], [0, 0, 1, 1], [], []>} : vector<64x4xbf16>, vector<4x128xbf16>, vector<64x128xf32> -> vector<64x128xf32>
    %15 = arith.addf %9, %14 : vector<64x128xf32>
    %c0_12 = arith.constant 0 : index
    %c0_13 = arith.constant 0 : index
    %16 = vector.load %arg7[%c0_12, %c0_13] : memref<64x128xf32, #tpu.memory_space<vmem>>, vector<64x128xf32>
    %17 = arith.addf %16, %15 : vector<64x128xf32>
    %c0_14 = arith.constant 0 : index
    %c0_15 = arith.constant 0 : index
    %18 = vector.load %arg7[%c0_14, %c0_15] : memref<64x128xf32, #tpu.memory_space<vmem>>, vector<64x128xf32>
    tpu.vector_store %arg7[%c0_14, %c0_15], %17 {strides = array<i32>} : memref<64x128xf32, #tpu.memory_space<vmem>>, vector<64x128xf32>,
    %c7_i32 = arith.constant 7 : i32
    %19 = arith.cmpi eq, %arg2, %c7_i32 : i32
    %20 = arith.extui %19 : i1 to i32
    %c0_i32_16 = arith.constant 0 : i32
    %21 = arith.cmpi ne, %20, %c0_i32_16 : i32
    scf.if %21 {
      %c0_17 = arith.constant 0 : index
      %c0_18 = arith.constant 0 : index
      %22 = vector.load %arg7[%c0_17, %c0_18] : memref<64x128xf32, #tpu.memory_space<vmem>>, vector<64x128xf32>
      %c0_19 = arith.constant 0 : index
      %c0_20 = arith.constant 0 : index
      %23 = vector.load %arg5[%c0_19, %c0_20] : memref<1x128xf32, #tpu.memory_space<vmem>>, vector<1x128xf32>
      %24 = vector.broadcast %23 : vector<1x128xf32> to vector<64x128xf32>
      %25 = arith.addf %22, %24 : vector<64x128xf32>
      %cst_21 = arith.constant dense<0.000000e+00> : vector<128xf32>
      %26 = vector.multi_reduction <add>, %25, %cst_21 [0] : vector<64x128xf32> to vector<128xf32>
      %27 = vector.shape_cast %26 : vector<128xf32> to vector<1x128xf32>
      %cst_22 = arith.constant 6.400000e+01 : f32
      %28 = vector.broadcast %cst_22 : f32 to vector<1x128xf32>
      %29 = arith.divf %27, %28 : vector<1x128xf32>
      %30 = vector.broadcast %29 : vector<1x128xf32> to vector<64x128xf32>
      %31 = arith.subf %25, %30 : vector<64x128xf32>
      %32 = arith.mulf %31, %31 : vector<64x128xf32>
      %cst_23 = arith.constant dense<0.000000e+00> : vector<128xf32>
      %33 = vector.multi_reduction <add>, %32, %cst_23 [0] : vector<64x128xf32> to vector<128xf32>
      %34 = vector.shape_cast %33 : vector<128xf32> to vector<1x128xf32>
      %cst_24 = arith.constant 6.400000e+01 : f32
      %35 = vector.broadcast %cst_24 : f32 to vector<1x128xf32>
      %36 = arith.divf %34, %35 : vector<1x128xf32>
      %37 = vector.broadcast %29 : vector<1x128xf32> to vector<64x128xf32>
      %38 = arith.subf %25, %37 : vector<64x128xf32>
      %cst_25 = arith.constant 9.99999974E-6 : f32
      %39 = vector.broadcast %cst_25 : f32 to vector<1x128xf32>
      %40 = arith.addf %36, %39 : vector<1x128xf32>
      %41 = math.rsqrt %40 : vector<1x128xf32>
      %42 = vector.broadcast %41 : vector<1x128xf32> to vector<64x128xf32>
      %43 = arith.mulf %38, %42 : vector<64x128xf32>
      %cst_26 = arith.constant 0.000000e+00 : f32
      %44 = vector.broadcast %cst_26 : f32 to vector<64x128xf32>
      %45 = arith.cmpf oge, %43, %44 : vector<64x128xf32>
      %cst_27 = arith.constant 2.000000e-01 : f32
      %46 = vector.broadcast %cst_27 : f32 to vector<64x128xf32>
      %47 = arith.mulf %46, %43 : vector<64x128xf32>
      %48 = arith.select %45, %43, %47 : vector<64x128xi1>, vector<64x128xf32>
      %49 = vector.shape_cast %48 : vector<64x128xf32> to vector<1x64x128xf32>
      %c0_28 = arith.constant 0 : index
      %c0_29 = arith.constant 0 : index
      %c0_30 = arith.constant 0 : index
      %50 = vector.load %arg6[%c0_28, %c0_29, %c0_30] : memref<1x64x128xf32, #tpu.memory_space<vmem>>, vector<1x64x128xf32>
      tpu.vector_store %arg6[%c0_28, %c0_29, %c0_30], %49 {strides = array<i32>} : memref<1x64x128xf32, #tpu.memory_space<vmem>>, vector<1x64x128xf32>,
    } else {
    }
    return
  }
  func.func @transform_0(%arg0: i32, %arg1: i32, %arg2: i32) -> (i32, i32, i32, i32) {
    %c0_i32 = arith.constant 0 : i32
    %c0_i32_0 = arith.constant 0 : i32
    %c0_i32_1 = arith.constant 0 : i32
    return %arg2, %arg0, %c0_i32, %c0_i32_0 : i32, i32, i32, i32
  }
  func.func @transform_1(%arg0: i32, %arg1: i32, %arg2: i32) -> (i32, i32, i32, i32) {
    %c0_i32 = arith.constant 0 : i32
    %c0_i32_0 = arith.constant 0 : i32
    %c0_i32_1 = arith.constant 0 : i32
    return %arg2, %c0_i32, %c0_i32_0, %arg1 : i32, i32, i32, i32
  }
  func.func @transform_2(%arg0: i32, %arg1: i32, %arg2: i32) -> (i32, i32) {
    %c0_i32 = arith.constant 0 : i32
    %c0_i32_0 = arith.constant 0 : i32
    return %c0_i32, %arg1 : i32, i32
  }
  func.func @transform_3(%arg0: i32, %arg1: i32, %arg2: i32) -> (i32, i32, i32) {
    %c0_i32 = arith.constant 0 : i32
    %c0_i32_0 = arith.constant 0 : i32
    return %arg0, %c0_i32, %arg1 : i32, i32, i32
  }
}

</mosaic_0001>

<llo_original>
// kernel: downsample_forward.1
$region0: #{downsample_forward.1}
  #allocation0 [shape = 'u32[]', space=smem, size = 0x4, offset = 0x4, fixed_abs, tag = 'smem constant byte address 0x4 - core index']
  #allocation1 [shape = 'u32[144,128]{1,0:T(1,128)}', space=vmem, size = 0x12000, scoped, tag = 'internal scratch']
  #allocation2 [shape = 'f32[64,128]{1,0:T(8,128)}', space=vmem, size = 0x8000, scoped, tag = 'scratch operand']
  %s0 = inlined_call_operand.vmem [shape: f32[8,2,72,4], index: 0, kind: input, shape index: {}]
  %s1 = inlined_call_operand.vmem [shape: bf16[8,2,4,128], index: 1, kind: input, shape index: {}]
  %s2 = inlined_call_operand.vmem [shape: f32[1,128], index: 2, kind: input, shape index: {}]
  %s3 = inlined_call_operand.vmem [shape: f32[2,64,128], index: 3, kind: output, shape index: {}]
  %s4 = sld [smem:[#allocation0]]
  $region53: #{downsample_forward.1} parent=0
    _
  %s6 = ssub.s32 1, %s4
  %s7 = scalar_select 0, %s6, %s4
  loop: start=0, step=1, limit=18
  $region2: #{downsample_forward.1} parent=0 // loop_pre_header
    _
  $region3: #{downsample_forward.1} parent=0 // loop_header
    %s9 = sphi 0, %s13
    %p10 = scmp.ge.s32.totalorder %s9, 18
    %s16 = sphi 0, %s35
    %s17 = sphi 0, %s31
    %s18 = sphi 0, %s27
    %s19 = sphi 0, %s16
    %s20 = sphi 0, %s17
    %s21 = sphi 0, %s18
    %s22 = sphi 0, %s19
    %s23 = sphi 0, %s20
    %s24 = sphi 0, %s21
    %s40 = sphi 0, %s42
    %s43 = sphi 0, %s40
    %s44 = sphi 0, %s43
    %s60 = sphi 0, %s44
    %s68 = sphi 0, %s70
    %s71 = sphi 0, %s68
    %s72 = sphi 0, %s71
    %s88 = sphi 0, %s72
    %s94 = sphi 0, %s96
    %s97 = sphi 0, %s94
    %s98 = sphi 0, %s97
    %s114 = sphi 0, %s98
    %s122 = sphi 0, %s124
    %s125 = sphi 0, %s122
    %s126 = sphi 0, %s125
    %s142 = sphi 0, %s126
  $region4: #{downsample_forward.1} parent=0 // loop_header_branch
    %12 = sbr.rel (%p10) target = $region8
  $region5: #{downsample_forward.1} parent=0 // loop_body
    %s14 = ssub.s32 %s9, 1
    %s15 = ssub.s32 %s9, 2
    %s25 = sadd.s32 1, %s18
    %p26 = scmp.ge.s32.totalorder %s25, 8
    %s27 = scalar_select %p26, 0, %s25
    %s28 = sadd.s32 1, %s17
    %s29 = scalar_select %p26, %s28, %s17
    %p30 = scmp.ge.s32.totalorder %s29, 1
    %s31 = scalar_select %p30, 0, %s29
    %s32 = sadd.s32 1, %s16
    %s33 = scalar_select %p30, %s32, %s16
    %p34 = scmp.ge.s32.totalorder %s33, 2
    %s35 = scalar_select %p34, 0, %s33
    %s36 = ssub.s32 %s18, %s27
    %s37 = ssub.s32 %s16, %s35
    %s38 = sor.u32 %s36, %s37
    %p39 = scmp.eq.s32.totalorder %s38, 0
    %s41 = sadd.s32 %s40, 1
    %s42 = scalar_select %p39, %s40, %s41
    %p45 = pneg %p39
    %p46 = scmp.eq.s32.totalorder %s9, 15
    %p47 = por %p45, %p46
    %p48 = scmp.ne.s32.totalorder %s40, %s43
    %p49 = scmp.eq.s32.totalorder %s9, 0
    %p50 = por %p48, %p49
    %p51 = scmp.ne.s32.totalorder %s40, %s43
    %p52 = scmp.eq.s32.totalorder %s14, 15
    %p53 = por %p51, %p52
    %p54 = scmp.ne.s32.totalorder %s43, %s44
    %p55 = scmp.eq.s32.totalorder %s14, 0
    %p56 = por %p54, %p55
    %p57 = scmp.ne.s32.totalorder %s43, %s44
    %p58 = scmp.eq.s32.totalorder %s15, 15
    %p59 = por %p57, %p58
    %p61 = scmp.ne.s32.totalorder %s44, %s60
    %p62 = scmp.eq.s32.totalorder %s15, 0
    %p63 = por %p61, %p62
    %s64 = ssub.s32 %s18, %s27
    %s65 = ssub.s32 %s17, %s31
    %s66 = sor.u32 %s64, %s65
    %p67 = scmp.eq.s32.totalorder %s66, 0
    %s69 = sadd.s32 %s68, 1
    %s70 = scalar_select %p67, %s68, %s69
    %p73 = pneg %p67
    %p74 = scmp.eq.s32.totalorder %s9, 15
    %p75 = por %p73, %p74
    %p76 = scmp.ne.s32.totalorder %s68, %s71
    %p77 = scmp.eq.s32.totalorder %s9, 0
    %p78 = por %p76, %p77
    %p79 = scmp.ne.s32.totalorder %s68, %s71
    %p80 = scmp.eq.s32.totalorder %s14, 15
    %p81 = por %p79, %p80
    %p82 = scmp.ne.s32.totalorder %s71, %s72
    %p83 = scmp.eq.s32.totalorder %s14, 0
    %p84 = por %p82, %p83
    %p85 = scmp.ne.s32.totalorder %s71, %s72
    %p86 = scmp.eq.s32.totalorder %s15, 15
    %p87 = por %p85, %p86
    %p89 = scmp.ne.s32.totalorder %s72, %s88
    %p90 = scmp.eq.s32.totalorder %s15, 0
    %p91 = por %p89, %p90
    %s92 = ssub.s32 %s17, %s31
    %p93 = scmp.eq.s32.totalorder %s92, 0
    %s95 = sadd.s32 %s94, 1
    %s96 = scalar_select %p93, %s94, %s95
    %p99 = pneg %p93
    %p100 = scmp.eq.s32.totalorder %s9, 15
    %p101 = por %p99, %p100
    %p102 = scmp.ne.s32.totalorder %s94, %s97
    %p103 = scmp.eq.s32.totalorder %s9, 0
    %p104 = por %p102, %p103
    %p105 = scmp.ne.s32.totalorder %s94, %s97
    %p106 = scmp.eq.s32.totalorder %s14, 15
    %p107 = por %p105, %p106
    %p108 = scmp.ne.s32.totalorder %s97, %s98
    %p109 = scmp.eq.s32.totalorder %s14, 0
    %p110 = por %p108, %p109
    %p111 = scmp.ne.s32.totalorder %s97, %s98
    %p112 = scmp.eq.s32.totalorder %s15, 15
    %p113 = por %p111, %p112
    %p115 = scmp.ne.s32.totalorder %s98, %s114
    %p116 = scmp.eq.s32.totalorder %s15, 0
    %p117 = por %p115, %p116
    %s118 = ssub.s32 %s16, %s35
    %s119 = ssub.s32 %s17, %s31
    %s120 = sor.u32 %s118, %s119
    %p121 = scmp.eq.s32.totalorder %s120, 0
    %s123 = sadd.s32 %s122, 1
    %s124 = scalar_select %p121, %s122, %s123
    %p127 = pneg %p121
    %p128 = scmp.eq.s32.totalorder %s9, 15
    %p129 = por %p127, %p128
    %p130 = scmp.ne.s32.totalorder %s122, %s125
    %p131 = scmp.eq.s32.totalorder %s9, 0
    %p132 = por %p130, %p131
    %p133 = scmp.ne.s32.totalorder %s122, %s125
    %p134 = scmp.eq.s32.totalorder %s14, 15
    %p135 = por %p133, %p134
    %p136 = scmp.ne.s32.totalorder %s125, %s126
    %p137 = scmp.eq.s32.totalorder %s14, 0
    %p138 = por %p136, %p137
    %p139 = scmp.ne.s32.totalorder %s125, %s126
    %p140 = scmp.eq.s32.totalorder %s15, 15
    %p141 = por %p139, %p140
    %p143 = scmp.ne.s32.totalorder %s126, %s142
    %p144 = scmp.eq.s32.totalorder %s15, 0
    %p145 = por %p143, %p144
    %p146 = scmp.le.s32.totalorder 1, %s9
    %p147 = scmp.lt.s32.totalorder %s9, 17
    %p148 = pnand %p146, %p147
    %p149 = pneg %p148
    // Predicated region
    $region9: #{downsample_forward.1} parent=5 // pred_check
      _
    $region10: #{downsample_forward.1} parent=5 // pred_check_branch
      %151 = sbr.rel (%p148) target = $region12
    $region11: #{downsample_forward.1} parent=5 // pred_region
      %s152 = ssub.s32 %s9, 1
      // Predicated region
      $region13: #{downsample_forward.1} parent=11 // pred_check
        %p153 = pneg %p110
      $region14: #{downsample_forward.1} parent=11 // pred_check_branch
        %155 = sbr.rel (%p153) target = $region16
      $region15: #{downsample_forward.1} parent=11 // pred_region
        %p156 = scmp.lt.s32.totalorder %s20, 0
        %s157 = scalar_select %p156, %s20, 0
        %s158 = scalar_lea.vmem %s2, %s157
      $region16: #{downsample_forward.1} parent=11 // pred_fallthru
        _
    $region12: #{downsample_forward.1} parent=5 // pred_fallthru
      _
    %p159 = scmp.lt.s32.totalorder %s9, 16
    // Predicated region
    $region17: #{downsample_forward.1} parent=5 // pred_check
      %p160 = pneg %p159
    $region18: #{downsample_forward.1} parent=5 // pred_check_branch
      %162 = sbr.rel (%p160) target = $region20
    $region19: #{downsample_forward.1} parent=5 // pred_region
      // Predicated region
      $region21: #{downsample_forward.1} parent=19 // pred_check
        %p163 = pneg %p50
      $region22: #{downsample_forward.1} parent=19 // pred_check_branch
        %165 = sbr.rel (%p163) target = $region24
      $region23: #{downsample_forward.1} parent=19 // pred_region
        %p166 = scmp.lt.s32.totalorder %s18, 7
        %s167 = scalar_select %p166, %s18, 7
        %p168 = scmp.lt.s32.totalorder %s16, 1
        %s169 = scalar_select %p168, %s16, 1
        %s170 = smul.addr %s169, 9
        %s171 = smul.addr %s167, 18
        %s172 = sadd.s32 %s170, %s171
        %s173 = smul.addr %s172, 8
        %s174 = scalar_lea.vmem %s0, %s173
      $region24: #{downsample_forward.1} parent=19 // pred_fallthru
        _
      // Predicated region
      $region25: #{downsample_forward.1} parent=19 // pred_check
        %p175 = pneg %p78
      $region26: #{downsample_forward.1} parent=19 // pred_check_branch
        %177 = sbr.rel (%p175) target = $region28
      $region27: #{downsample_forward.1} parent=19 // pred_region
        %p178 = scmp.lt.s32.totalorder %s18, 7
        %s179 = scalar_select %p178, %s18, 7
        %p180 = scmp.lt.s32.totalorder %s17, 0
        %s181 = scalar_select %p180, %s17, 0
        %s182 = smul.addr %s179, 2
        %s183 = sadd.s32 %s181, %s182
        %s184 = smul.addr %s183, 2
        %s185 = scalar_lea.vmem %s1, %s184
      $region28: #{downsample_forward.1} parent=19 // pred_fallthru
        _
    $region20: #{downsample_forward.1} parent=5 // pred_fallthru
      _
    %p186 = scmp.le.s32.totalorder 1, %s9
    %p187 = scmp.lt.s32.totalorder %s9, 17
    %p188 = pnand %p186, %p187
    %p189 = pneg %p188
    // Predicated region
    $region29: #{downsample_forward.1} parent=5 // pred_check
      _
    $region30: #{downsample_forward.1} parent=5 // pred_check_branch
      %191 = sbr.rel (%p188) target = $region32
    $region31: #{downsample_forward.1} parent=5 // pred_region
      %s192 = ssub.s32 %s9, 1
      %p193 = scmp.lt.s32.totalorder %s21, 7
      %s194 = scalar_select %p193, %s21, 7
      %p195 = scmp.lt.s32.totalorder %s19, 1
      %s196 = scalar_select %p195, %s19, 1
      %s197 = smul.addr %s196, 9
      %s198 = smul.addr %s194, 18
      %s199 = sadd.s32 %s197, %s198
      %s200 = smul.addr %s199, 8
      %s201 = scalar_lea.vmem %s0, %s200
      %p202 = pneg %p56
      %p203 = pneg %p53
      %p204 = scmp.lt.s32.totalorder %s21, 7
      %s205 = scalar_select %p204, %s21, 7
      %p206 = scmp.lt.s32.totalorder %s20, 0
      %s207 = scalar_select %p206, %s20, 0
      %s208 = smul.addr %s205, 2
      %s209 = sadd.s32 %s207, %s208
      %s210 = smul.addr %s209, 2
      %s211 = scalar_lea.vmem %s1, %s210
      %p212 = pneg %p84
      %p213 = pneg %p81
      %p214 = scmp.lt.s32.totalorder %s20, 0
      %s215 = scalar_select %p214, %s20, 0
      %s216 = scalar_lea.vmem %s2, %s215
      %p217 = pneg %p110
      %p218 = pneg %p107
      %p219 = pneg %p138
      %p220 = pneg %p135
      %p221 = scmp.lt.s32.totalorder %s19, 1
      %s222 = scalar_select %p221, %s19, 1
      %p223 = scmp.lt.s32.totalorder %s20, 0
      %s224 = scalar_select %p223, %s20, 0
      %s225 = smul.addr %s222, 8
      %s226 = sadd.s32 %s224, %s225
      %s227 = smul.addr %s226, 8
      %s228 = scalar_lea.vmem %s3, %s227
      %p229 = scmp.lt.s32.totalorder %s21, 7
      %s230 = scalar_select %p229, %s21, 7
      %p231 = scmp.lt.s32.totalorder %s19, 1
      %s232 = scalar_select %p231, %s19, 1
      %s233 = smul.addr %s232, 9
      %s234 = smul.addr %s230, 18
      %s235 = sadd.s32 %s233, %s234
      %s236 = smul.addr %s235, 8
      %s237 = scalar_lea.vmem %s0, %s236
      %p238 = scmp.lt.s32.totalorder %s21, 7
      %s239 = scalar_select %p238, %s21, 7
      %p240 = scmp.lt.s32.totalorder %s20, 0
      %s241 = scalar_select %p240, %s20, 0
      %s242 = smul.addr %s239, 2
      %s243 = sadd.s32 %s241, %s242
      %s244 = smul.addr %s243, 2
      %s245 = scalar_lea.vmem %s1, %s244
      %p246 = scmp.lt.s32.totalorder %s20, 0
      %s247 = scalar_select %p246, %s20, 0
      %s248 = scalar_lea.vmem %s2, %s247
      %p249 = scmp.lt.s32.totalorder %s19, 1
      %s250 = scalar_select %p249, %s19, 1
      %p251 = scmp.lt.s32.totalorder %s20, 0
      %s252 = scalar_select %p251, %s20, 0
      %s253 = smul.addr %s250, 8
      %s254 = sadd.s32 %s252, %s253
      %s255 = smul.addr %s254, 8
      %s256 = scalar_lea.vmem %s3, %s255
      %p258 = scmp.eq.s32.totalorder %s21, 0
      // Predicated region
      $region33: #{downsample_forward.1} parent=31 // pred_check
        %p259 = pneg %p258
      $region34: #{downsample_forward.1} parent=31 // pred_check_branch
        %261 = sbr.rel (%p259) target = $region36
      $region35: #{downsample_forward.1} parent=31 // pred_region
        %262 = vst [vmem:[#allocation2] sm:$0xff] 0.0
        %263 = vst [vmem:[#allocation2 + $0x8] sm:$0xff] 0.0
        %264 = vst [vmem:[#allocation2 + $0x10] sm:$0xff] 0.0
        %265 = vst [vmem:[#allocation2 + $0x18] sm:$0xff] 0.0
        %266 = vst [vmem:[#allocation2 + $0x20] sm:$0xff] 0.0
        %267 = vst [vmem:[#allocation2 + $0x28] sm:$0xff] 0.0
        %268 = vst [vmem:[#allocation2 + $0x30] sm:$0xff] 0.0
        %269 = vst [vmem:[#allocation2 + $0x38] sm:$0xff] 0.0
      $region36: #{downsample_forward.1} parent=31 // pred_fallthru
        _
      %v270 = vld [vmem:[%s237] sm:$0xff]
      %v271 = vld [vmem:[%s237 + $0x8] sm:$0xff]
      %v272 = vld [vmem:[%s237 + $0x10] sm:$0xff]
      %v273 = vld [vmem:[%s237 + $0x18] sm:$0xff]
      %v274 = vld [vmem:[%s237 + $0x20] sm:$0xff]
      %v275 = vld [vmem:[%s237 + $0x28] sm:$0xff]
      %v276 = vld [vmem:[%s237 + $0x30] sm:$0xff]
      %v277 = vld [vmem:[%s237 + $0x38] sm:$0xff]
      %v278 = vld [vmem:[%s237 + $0x40] sm:$0xff]
      %v279 = vpack.c.bf16 %v271, %v270
      %v280 = vpack.c.bf16 %v273, %v272
      %v281 = vpack.c.bf16 %v275, %v274
      %v282 = vpack.c.bf16 %v277, %v276
      %v283 = vld [vmem:[%s245] sm:$0x3]
      %v284 = vpack.c.bf16 %v272, %v271
      %v285 = vpack.c.bf16 %v274, %v273
      %v286 = vpack.c.bf16 %v276, %v275
      %v287 = vpack.c.bf16 %v278, %v277
      %s288 = scalar_lea.vmem %s245, 2
      %v289 = vld [vmem:[%s288] sm:$0x3]
      %vm290 = vcmask 31744
      %v292 = vsel %vm290, %v284, 0
      %v295 = vsel %vm290, %v285, 0
      %v298 = vsel %vm290, %v286, 0
      %v301 = vsel %vm290, %v287, 0
      %vm303 = vcmask 1041408
      %v305 = vsel %vm303, %v289, 0
      %307 = vmatprep.subr.bf16.mxu0 0
      %308 = vmatpush1.bf16.msra.mxu0 %v305
      %309 = vmatprep.subr.bf16.mxu0 0
      %310 = vmatpush1.bf16.msra.mxu0 0
      %311 = vmatprep.subr.bf16.mxu0 0
      %312 = vmatpush1.bf16.msra.mxu0 0
      %313 = vmatprep.subr.bf16.mxu0 0
      %314 = vmatpush1.bf16.msra.mxu0 0
      %315 = vmatprep.subr.bf16.mxu0 0
      %316 = vmatpush1.bf16.msra.mxu0 0
      %317 = vmatprep.subr.bf16.mxu0 0
      %318 = vmatpush1.bf16.msra.mxu0 0
      %319 = vmatprep.subr.bf16.mxu0 0
      %320 = vmatpush1.bf16.msra.mxu0 0
      %321 = vmatprep.subr.bf16.mxu0 0
      %322 = vmatpush1.bf16.msra.mxu0 0
      %323 = vmatprep.subr.bf16.mxu0 0
      %324 = vmatpush1.bf16.msra.mxu0 0
      %325 = vmatprep.subr.bf16.mxu0 0
      %326 = vmatpush1.bf16.msra.mxu0 0
      %327 = vmatprep.subr.bf16.mxu0 0
      %328 = vmatpush1.bf16.msra.mxu0 0
      %329 = vmatprep.subr.bf16.mxu0 0
      %330 = vmatpush1.bf16.msra.mxu0 0
      %331 = vmatprep.subr.bf16.mxu0 0
      %332 = vmatpush1.bf16.msra.mxu0 0
      %333 = vmatprep.subr.bf16.mxu0 0
      %334 = vmatpush1.bf16.msra.mxu0 0
      %335 = vmatprep.subr.bf16.mxu0 0
      %336 = vmatpush1.bf16.msra.mxu0 0
      %337 = vmatprep.subr.bf16.mxu0 0
      %338 = vmatpush1.bf16.msra.mxu0 0
      %339 = vmatprep.mubr.bf16.mxu0 0
      %340 = vmatmul.mubr.bf16.gmra.mrb[0].mxu0 %v292
      %v341 = vpop.f32.mrb[0].mxu0
      %v342 = vadd.f32 0.0, %v341
      %v343 = vpop.f32.mrb[0].mxu0
      %v344 = vpop.f32.mrb[0].mxu0
      %v345 = vadd.f32 0.0, %v344
      %v346 = vpop.f32.mrb[0].mxu0
      %347 = vmatprep.mubr.bf16.mxu0 0
      %348 = vmatmul.mubr.bf16.gmra.mrb[0].mxu0 %v295
      %v349 = vpop.f32.mrb[0].mxu0
      %v350 = vadd.f32 0.0, %v349
      %v351 = vpop.f32.mrb[0].mxu0
      %v352 = vpop.f32.mrb[0].mxu0
      %v353 = vadd.f32 0.0, %v352
      %v354 = vpop.f32.mrb[0].mxu0
      %355 = vmatprep.mubr.bf16.mxu0 0
      %356 = vmatmul.mubr.bf16.gmra.mrb[0].mxu0 %v298
      %v357 = vpop.f32.mrb[0].mxu0
      %v358 = vadd.f32 0.0, %v357
      %v359 = vpop.f32.mrb[0].mxu0
      %v360 = vpop.f32.mrb[0].mxu0
      %v361 = vadd.f32 0.0, %v360
      %v362 = vpop.f32.mrb[0].mxu0
      %363 = vmatprep.mubr.bf16.mxu0 0
      %364 = vmatmul.mubr.bf16.gmra.mrb[0].mxu0 %v301
      %v365 = vpop.f32.mrb[0].mxu0
      %v366 = vadd.f32 0.0, %v365
      %v367 = vpop.f32.mrb[0].mxu0
      %v368 = vpop.f32.mrb[0].mxu0
      %v369 = vadd.f32 0.0, %v368
      %v370 = vpop.f32.mrb[0].mxu0
      %371 = vdwg.mxu0
      %v373 = vsel %vm290, %v279, 0
      %v376 = vsel %vm290, %v280, 0
      %v379 = vsel %vm290, %v281, 0
      %v382 = vsel %vm290, %v282, 0
      %v385 = vsel %vm303, %v283, 0
      %387 = vmatprep.subr.bf16.mxu0 0
      %388 = vmatpush1.bf16.msra.mxu0 %v385
      %389 = vmatprep.subr.bf16.mxu0 0
      %390 = vmatpush1.bf16.msra.mxu0 0
      %391 = vmatprep.subr.bf16.mxu0 0
      %392 = vmatpush1.bf16.msra.mxu0 0
      %393 = vmatprep.subr.bf16.mxu0 0
      %394 = vmatpush1.bf16.msra.mxu0 0
      %395 = vmatprep.subr.bf16.mxu0 0
      %396 = vmatpush1.bf16.msra.mxu0 0
      %397 = vmatprep.subr.bf16.mxu0 0
      %398 = vmatpush1.bf16.msra.mxu0 0
      %399 = vmatprep.subr.bf16.mxu0 0
      %400 = vmatpush1.bf16.msra.mxu0 0
      %401 = vmatprep.subr.bf16.mxu0 0
      %402 = vmatpush1.bf16.msra.mxu0 0
      %403 = vmatprep.subr.bf16.mxu0 0
      %404 = vmatpush1.bf16.msra.mxu0 0
      %405 = vmatprep.subr.bf16.mxu0 0
      %406 = vmatpush1.bf16.msra.mxu0 0
      %407 = vmatprep.subr.bf16.mxu0 0
      %408 = vmatpush1.bf16.msra.mxu0 0
      %409 = vmatprep.subr.bf16.mxu0 0
      %410 = vmatpush1.bf16.msra.mxu0 0
      %411 = vmatprep.subr.bf16.mxu0 0
      %412 = vmatpush1.bf16.msra.mxu0 0
      %413 = vmatprep.subr.bf16.mxu0 0
      %414 = vmatpush1.bf16.msra.mxu0 0
      %415 = vmatprep.subr.bf16.mxu0 0
      %416 = vmatpush1.bf16.msra.mxu0 0
      %417 = vmatprep.subr.bf16.mxu0 0
      %418 = vmatpush1.bf16.msra.mxu0 0
      %419 = vmatprep.mubr.bf16.mxu0 0
      %420 = vmatmul.mubr.bf16.gmra.mrb[0].mxu0 %v373
      %v421 = vpop.f32.mrb[0].mxu0
      %v422 = vadd.f32 %v342, %v421
      %v423 = vpop.f32.mrb[0].mxu0
      %v424 = vpop.f32.mrb[0].mxu0
      %v425 = vadd.f32 %v345, %v424
      %v426 = vpop.f32.mrb[0].mxu0
      %427 = vmatprep.mubr.bf16.mxu0 0
      %428 = vmatmul.mubr.bf16.gmra.mrb[0].mxu0 %v376
      %v429 = vpop.f32.mrb[0].mxu0
      %v430 = vadd.f32 %v350, %v429
      %v431 = vpop.f32.mrb[0].mxu0
      %v432 = vpop.f32.mrb[0].mxu0
      %v433 = vadd.f32 %v353, %v432
      %v434 = vpop.f32.mrb[0].mxu0
      %435 = vmatprep.mubr.bf16.mxu0 0
      %436 = vmatmul.mubr.bf16.gmra.mrb[0].mxu0 %v379
      %v437 = vpop.f32.mrb[0].mxu0
      %v438 = vadd.f32 %v358, %v437
      %v439 = vpop.f32.mrb[0].mxu0
      %v440 = vpop.f32.mrb[0].mxu0
      %v441 = vadd.f32 %v361, %v440
      %v442 = vpop.f32.mrb[0].mxu0
      %443 = vmatprep.mubr.bf16.mxu0 0
      %444 = vmatmul.mubr.bf16.gmra.mrb[0].mxu0 %v382
      %v445 = vpop.f32.mrb[0].mxu0
      %v446 = vadd.f32 %v366, %v445
      %v447 = vpop.f32.mrb[0].mxu0
      %v448 = vpop.f32.mrb[0].mxu0
      %v449 = vadd.f32 %v369, %v448
      %v450 = vpop.f32.mrb[0].mxu0
      %451 = vdwg.mxu0
      %v452 = vld [vmem:[#allocation2] sm:$0xff]
      %v453 = vld [vmem:[#allocation2 + $0x8] sm:$0xff]
      %v454 = vld [vmem:[#allocation2 + $0x10] sm:$0xff]
      %v455 = vld [vmem:[#allocation2 + $0x18] sm:$0xff]
      %v456 = vld [vmem:[#allocation2 + $0x20] sm:$0xff]
      %v457 = vld [vmem:[#allocation2 + $0x28] sm:$0xff]
      %v458 = vld [vmem:[#allocation2 + $0x30] sm:$0xff]
      %v459 = vld [vmem:[#allocation2 + $0x38] sm:$0xff]
      %v460 = vadd.f32 %v452, %v422
      %v461 = vadd.f32 %v453, %v425
      %v462 = vadd.f32 %v454, %v430
      %v463 = vadd.f32 %v455, %v433
      %v464 = vadd.f32 %v456, %v438
      %v465 = vadd.f32 %v457, %v441
      %v466 = vadd.f32 %v458, %v446
      %v467 = vadd.f32 %v459, %v449
      %468 = vst [vmem:[#allocation2] sm:$0xff] %v460
      %469 = vst [vmem:[#allocation2 + $0x8] sm:$0xff] %v461
      %470 = vst [vmem:[#allocation2 + $0x10] sm:$0xff] %v462
      %471 = vst [vmem:[#allocation2 + $0x18] sm:$0xff] %v463
      %472 = vst [vmem:[#allocation2 + $0x20] sm:$0xff] %v464
      %473 = vst [vmem:[#allocation2 + $0x28] sm:$0xff] %v465
      %474 = vst [vmem:[#allocation2 + $0x30] sm:$0xff] %v466
      %475 = vst [vmem:[#allocation2 + $0x38] sm:$0xff] %v467
      %p476 = scmp.eq.s32.totalorder %s21, 7
      // Predicated region
      $region37: #{downsample_forward.1} parent=31 // pred_check
        %p477 = pneg %p476
      $region38: #{downsample_forward.1} parent=31 // pred_check_branch
        %479 = sbr.rel (%p477) target = $region40
      $region39: #{downsample_forward.1} parent=31 // pred_region
        %v480 = vld [vmem:[#allocation2] sm:$0xff]
        %v481 = vld [vmem:[#allocation2 + $0x8] sm:$0xff]
        %v482 = vld [vmem:[#allocation2 + $0x10] sm:$0xff]
        %v483 = vld [vmem:[#allocation2 + $0x18] sm:$0xff]
        %v484 = vld [vmem:[#allocation2 + $0x20] sm:$0xff]
        %v485 = vld [vmem:[#allocation2 + $0x28] sm:$0xff]
        %v486 = vld [vmem:[#allocation2 + $0x30] sm:$0xff]
        %v487 = vld [vmem:[#allocation2 + $0x38] sm:$0xff]
        %v488 = vld [vmem:[%s248] sm:$0x1]
        %v490 = vlaneseq
        %v491 = vshrl.u32 %v490, 7
        %v492 = vsub.s32 0, %v491
        %v493 = vrot.slane %v488, %v492
        %v495 = vadd.f32 %v480, %v493
        %v496 = vadd.f32 %v481, %v493
        %v497 = vadd.f32 %v482, %v493
        %v498 = vadd.f32 %v483, %v493
        %v499 = vadd.f32 %v484, %v493
        %v500 = vadd.f32 %v485, %v493
        %v501 = vadd.f32 %v486, %v493
        %v502 = vadd.f32 %v487, %v493
        %v503 = vadd.f32 %v495, %v496
        %v504 = vadd.f32 %v503, %v497
        %v505 = vadd.f32 %v504, %v498
        %v506 = vadd.f32 %v505, %v499
        %v507 = vadd.f32 %v506, %v500
        %v508 = vadd.f32 %v507, %v501
        %v509 = vadd.f32 %v508, %v502
        %v510 = vrot.slane %v509, 4
        %v511 = vadd.f32 %v509, %v510
        %v512 = vrot.slane %v511, 2
        %v513 = vadd.f32 %v511, %v512
        %v514 = vrot.slane %v513, 1
        %v515 = vadd.f32 %v513, %v514
        %v516 = vrcp.pop 64.0
        %v517 = vmul.f32 %v515, %v516
        %v518 = vsub.f32 %v495, %v517
        %v519 = vsub.f32 %v496, %v517
        %v520 = vsub.f32 %v497, %v517
        %v521 = vsub.f32 %v498, %v517
        %v522 = vsub.f32 %v499, %v517
        %v523 = vsub.f32 %v500, %v517
        %v524 = vsub.f32 %v501, %v517
        %v525 = vsub.f32 %v502, %v517
        %v526 = vmul.f32 %v518, %v518
        %v527 = vmul.f32 %v519, %v519
        %v528 = vmul.f32 %v520, %v520
        %v529 = vmul.f32 %v521, %v521
        %v530 = vmul.f32 %v522, %v522
        %v531 = vmul.f32 %v523, %v523
        %v532 = vmul.f32 %v524, %v524
        %v533 = vmul.f32 %v525, %v525
        %v534 = vadd.f32 %v526, %v527
        %v535 = vadd.f32 %v534, %v528
        %v536 = vadd.f32 %v535, %v529
        %v537 = vadd.f32 %v536, %v530
        %v538 = vadd.f32 %v537, %v531
        %v539 = vadd.f32 %v538, %v532
        %v540 = vadd.f32 %v539, %v533
        %v541 = vrot.slane %v540, 4
        %v542 = vadd.f32 %v540, %v541
        %v543 = vrot.slane %v542, 2
        %v544 = vadd.f32 %v542, %v543
        %v545 = vrot.slane %v544, 1
        %v546 = vadd.f32 %v544, %v545
        %v547 = vmul.f32 %v546, %v516
        %v548 = vadd.f32 %v547, 1e-05
        %v549 = vrsqrt.pop %v548
        %v550 = vmul.f32 %v518, %v549
        %v551 = vmul.f32 %v519, %v549
        %v552 = vmul.f32 %v520, %v549
        %v553 = vmul.f32 %v521, %v549
        %v554 = vmul.f32 %v522, %v549
        %v555 = vmul.f32 %v523, %v549
        %v556 = vmul.f32 %v524, %v549
        %v557 = vmul.f32 %v525, %v549
        %vm558 = vcmp.ge.f32.partialorder %v550, 0.0
        %vm559 = vcmp.ge.f32.partialorder %v551, 0.0
        %vm560 = vcmp.ge.f32.partialorder %v552, 0.0
        %vm561 = vcmp.ge.f32.partialorder %v553, 0.0
        %vm562 = vcmp.ge.f32.partialorder %v554, 0.0
        %vm563 = vcmp.ge.f32.partialorder %v555, 0.0
        %vm564 = vcmp.ge.f32.partialorder %v556, 0.0
        %vm565 = vcmp.ge.f32.partialorder %v557, 0.0
        %v566 = vmul.f32 %v550, 0.2
        %v567 = vmul.f32 %v551, 0.2
        %v568 = vmul.f32 %v552, 0.2
        %v569 = vmul.f32 %v553, 0.2
        %v570 = vmul.f32 %v554, 0.2
        %v571 = vmul.f32 %v555, 0.2
        %v572 = vmul.f32 %v556, 0.2
        %v573 = vmul.f32 %v557, 0.2
        %v574 = vsel %vm558, %v550, %v566
        %v575 = vsel %vm559, %v551, %v567
        %v576 = vsel %vm560, %v552, %v568
        %v577 = vsel %vm561, %v553, %v569
        %v578 = vsel %vm562, %v554, %v570
        %v579 = vsel %vm563, %v555, %v571
        %v580 = vsel %vm564, %v556, %v572
        %v581 = vsel %vm565, %v557, %v573
        %582 = vst [vmem:[%s256] sm:$0xff] %v574
        %583 = vst [vmem:[%s256 + $0x8] sm:$0xff] %v575
        %584 = vst [vmem:[%s256 + $0x10] sm:$0xff] %v576
        %585 = vst [vmem:[%s256 + $0x18] sm:$0xff] %v577
        %586 = vst [vmem:[%s256 + $0x20] sm:$0xff] %v578
        %587 = vst [vmem:[%s256 + $0x28] sm:$0xff] %v579
        %588 = vst [vmem:[%s256 + $0x30] sm:$0xff] %v580
        %589 = vst [vmem:[%s256 + $0x38] sm:$0xff] %v581
      $region40: #{downsample_forward.1} parent=31 // pred_fallthru
        _
      %p590 = scmp.lt.s32.totalorder %s19, 1
      %s591 = scalar_select %p590, %s19, 1
      %p592 = scmp.lt.s32.totalorder %s20, 0
      %s593 = scalar_select %p592, %s20, 0
      %s594 = smul.addr %s591, 8
      %s595 = sadd.s32 %s593, %s594
      %s596 = smul.addr %s595, 8
      %s597 = scalar_lea.vmem %s3, %s596
      // Predicated region
      $region41: #{downsample_forward.1} parent=31 // pred_check
        %p598 = pneg %p135
      $region42: #{downsample_forward.1} parent=31 // pred_check_branch
        %600 = sbr.rel (%p598) target = $region44
      $region43: #{downsample_forward.1} parent=31 // pred_region
        _
      $region44: #{downsample_forward.1} parent=31 // pred_fallthru
        _
    $region32: #{downsample_forward.1} parent=5 // pred_fallthru
      _
    %p601 = scmp.le.s32.totalorder 2, %s9
    // Predicated region
    $region45: #{downsample_forward.1} parent=5 // pred_check
      %p602 = pneg %p601
    $region46: #{downsample_forward.1} parent=5 // pred_check_branch
      %604 = sbr.rel (%p602) target = $region48
    $region47: #{downsample_forward.1} parent=5 // pred_region
      %s605 = ssub.s32 %s9, 2
      // Predicated region
      $region49: #{downsample_forward.1} parent=47 // pred_check
        %p606 = pneg %p141
      $region50: #{downsample_forward.1} parent=47 // pred_check_branch
        %608 = sbr.rel (%p606) target = $region52
      $region51: #{downsample_forward.1} parent=47 // pred_region
        %p609 = scmp.lt.s32.totalorder %s22, 1
        %s610 = scalar_select %p609, %s22, 1
        %p611 = scmp.lt.s32.totalorder %s23, 0
        %s612 = scalar_select %p611, %s23, 0
        %s613 = smul.addr %s610, 8
        %s614 = sadd.s32 %s612, %s613
        %s615 = smul.addr %s614, 8
        %s616 = scalar_lea.vmem %s3, %s615
      $region52: #{downsample_forward.1} parent=47 // pred_fallthru
        _
    $region48: #{downsample_forward.1} parent=5 // pred_fallthru
      _
  $region6: #{downsample_forward.1} parent=0 // loop_footer
    %s13 = sadd.s32 1, %s9
  $region7: #{downsample_forward.1} parent=0 // loop_footer_branch
    %8 = sbr.rel target = $region3
  $region8: #{downsample_forward.1} parent=0 // loop_exit
    _

</llo_original>
